<compile_context>
chip_gen: v5e
topology: v5e:2x2
jax: 0.10.0
libtpu: 0.0.40
codegen_flags: <defaults>
</compile_context>

<pallas_src>
import jax
import jax.numpy as jnp
from jax.experimental import pallas as pl
from jax.experimental.pallas import tpu as pltpu


# ----------------------------------------------------------------------------
# Pallas kernel: whole forward hot path for one batch tile (feature-major).
# ----------------------------------------------------------------------------
def snpdfc3_kernel(xt_ref, w1_ref, b1_ref, w2_ref, b2_ref, et_ref, b7_ref,
                   out_ref):
    # xt: [F, TB]   w1, w2: [F, F] (VMEM-resident)   b1, b2: [F, 1] (f32)
    # et: [F, TB] = (l_y(y) + w7)^T                  b7: (1,1) SMEM scalar
    # out: [1, TB]  (batch on the lane axis -> lane-dense stores)
    f32 = jnp.float32

    # linear1 + LeakyReLU(0.2): h^T = W1 @ x^T + b1 (MXU, f32 accumulate)
    h = jnp.dot(w1_ref[...], xt_ref[...], preferred_element_type=f32)
    h = h + b1_ref[...]                       # (F,1) column broadcast over lanes
    h = jnp.where(h > 0, h, 0.2 * h)          # VPU, kept in f32 (v5e-friendly)

    # linear2 + LeakyReLU(0.2)
    h2 = jnp.dot(w2_ref[...], h.astype(w2_ref.dtype), preferred_element_type=f32)
    h2 = h2 + b2_ref[...]
    h2 = jnp.where(h2 > 0, h2, 0.2 * h2)

    # l7 fused into the projection:
    #   out[b] = sum_f (emb_y[b,f] + w7[f]) * h2[f,b] + b7
    # sublane-axis reduce -> naturally a lane-dense (1, TB) row.
    proj = jnp.sum(h2 * et_ref[...].astype(f32), axis=0, keepdims=True)
    out_ref[...] = proj + b7_ref[0, 0]


def snpdfc3_forward(x, w1, b1, w2, b2, w7, b7, emb_y=None, *,
                    block_b=128, compute_dtype=jnp.bfloat16):
    """decoder_only=True forward of SNPDFC3.

    x      : [B, F]      w1, w2 : [F, F] (PyTorch [out, in] layout, SN applied)
    b1, b2 : [F]         w7     : [1, F]   b7 : [1]
    emb_y  : [B, F] (= spectral-normalized l_y gathered at y) or None.
    Returns [B, 1] float32.
    """
    B, F = x.shape
    f32 = jnp.float32
    nb = (B + block_b - 1) // block_b
    b_pad = nb * block_b

    # ---- wrapper-side layout plumbing (cheap XLA ops, off the hot path) -----
    # Feature-major activations, batch on the lane axis; pad batch to a tile.
    xt = jnp.pad(x, ((0, b_pad - B), (0, 0))).T.astype(compute_dtype)   # [F, Bp]
    # Fold l7's weight into the projection operand (h @ w7.T == sum(w7*h, -1)).
    if emb_y is None:
        emb_plus = jnp.broadcast_to(w7.astype(f32), (B, F))
    else:
        emb_plus = emb_y.astype(f32) + w7.astype(f32)
    et = jnp.pad(emb_plus, ((0, b_pad - B), (0, 0))).T.astype(compute_dtype)

    w1c = w1.astype(compute_dtype)            # [F, F], original [out,in] layout
    w2c = w2.astype(compute_dtype)
    b1c = b1.reshape(F, 1).astype(f32)        # columns: broadcast over lanes
    b2c = b2.reshape(F, 1).astype(f32)
    b7c = jnp.asarray(b7, f32).reshape(1, 1)  # SMEM scalar

    # NOTE(v7x VMEM): two resident [F,F] weights + double-buffered [F,TB] tiles
    # must fit the 32 MiB scoped / 64 MiB physical budget. bf16 weights (the
    # default here) cover F <= ~4096; beyond that add a K-tiling grid axis with
    # an f32 accumulator and raise vmem_limit_bytes.
    grid_spec = pltpu.PrefetchScalarGridSpec(
        num_scalar_prefetch=0,
        grid=(nb,),
        in_specs=[
            pl.BlockSpec((F, block_b), lambda i: (0, i)),       # x^T tile
            pl.BlockSpec((F, F), lambda i: (0, 0)),             # w1 (resident)
            pl.BlockSpec((F, 1), lambda i: (0, 0)),             # b1
            pl.BlockSpec((F, F), lambda i: (0, 0)),             # w2 (resident)
            pl.BlockSpec((F, 1), lambda i: (0, 0)),             # b2
            pl.BlockSpec((F, block_b), lambda i: (0, i)),       # (emb+w7)^T tile
            pl.BlockSpec(memory_space=pltpu.MemorySpace.SMEM),  # b7 scalar
        ],
        out_specs=pl.BlockSpec((1, block_b), lambda i: (0, i)),  # lane-dense
    )

    out_row = pl.pallas_call(
        snpdfc3_kernel,
        out_shape=jax.ShapeDtypeStruct((1, b_pad), f32),
        grid_spec=grid_spec,
        compiler_params=pltpu.CompilerParams(
            dimension_semantics=("parallel",)),   # shard batch tiles (v7x 2 TCs)
    )(xt, w1c, b1c, w2c, b2c, et, b7c)

    return out_row[0, :B].reshape(B, 1)


# ----------------------------------------------------------------------------
# Parameter setup (plain JAX glue): deterministic init + spectral norm.
# ----------------------------------------------------------------------------
def spectral_normalize(w, key, n_iter=1, eps=1e-12):
    """Mimics torch.nn.utils.spectral_norm: W / sigma(W) via power iteration."""
    out_dim, in_dim = w.shape
    u = jax.random.normal(key, (out_dim,), dtype=w.dtype)
    u = u / (jnp.linalg.norm(u) + eps)
    v = None
    for _ in range(n_iter):
        v = w.T @ u
        v = v / (jnp.linalg.norm(v) + eps)
        u = w @ v
        u = u / (jnp.linalg.norm(u) + eps)
    sigma = u @ (w @ v)
    return w / sigma


def xavier_uniform(key, shape, dtype=jnp.float32):
    fan_out, fan_in = shape
    a = (6.0 / (fan_in + fan_out)) ** 0.5
    return jax.random.uniform(key, shape, dtype=dtype, minval=-a, maxval=a)


def kaiming_uniform_linear(key, shape, dtype=jnp.float32):
    # torch nn.Linear default weight init: ~U(-1/sqrt(fan_in), 1/sqrt(fan_in))
    fan_in = shape[1]
    bound = 1.0 / (fan_in ** 0.5)
    return jax.random.uniform(key, shape, dtype=dtype, minval=-bound, maxval=bound)


if __name__ == "__main__":
    B = 256          # batch (2 grid steps of 128 -> exercises the pipeline)
    F = 128          # num_features (lane-friendly)
    NUM_CLASSES = 4  # num_classes > 0 so the projection (l_y) branch is used

    root = jax.random.PRNGKey(0)
    keys = jax.random.split(root, 12)

    # decoder_only=True path: h = x directly (encoder is external / unspecified)
    x = jax.random.normal(keys[0], (B, F), dtype=jnp.float32)
    y = jax.random.randint(keys[1], (B,), 0, NUM_CLASSES)

    # linear1 / linear2 : spectral_norm(nn.Linear(F, F))
    bound = 1.0 / F ** 0.5
    w1 = kaiming_uniform_linear(keys[2], (F, F))
    b1 = jax.random.uniform(keys[3], (F,), minval=-bound, maxval=bound)
    w2 = kaiming_uniform_linear(keys[4], (F, F))
    b2 = jax.random.uniform(keys[5], (F,), minval=-bound, maxval=bound)

    # l7 : spectral_norm(nn.Linear(F, 1)), xavier_uniform_ on weight
    w7 = xavier_uniform(keys[6], (1, F))
    b7 = jax.random.uniform(keys[7], (1,), minval=-bound, maxval=bound)

    # l_y : spectral_norm(nn.Embedding(NUM_CLASSES, F)), xavier_uniform_ weight
    w_ly = xavier_uniform(keys[8], (NUM_CLASSES, F))

    # Spectral normalization (parameter preprocessing, as in torch's fwd hook)
    w1_sn = spectral_normalize(w1, keys[9])
    w2_sn = spectral_normalize(w2, keys[10])
    w7_sn = spectral_normalize(w7, keys[11])
    w_ly_sn = spectral_normalize(w_ly, jax.random.PRNGKey(123))

    # Embedding lookup (gather) as JAX glue; projection reduce is in-kernel.
    emb_y = jnp.take(w_ly_sn, y, axis=0)

    # --- kernel, f32 path (exactness check vs. the original unfused math) ----
    out_f32 = snpdfc3_forward(x, w1_sn, b1, w2_sn, b2, w7_sn, b7, emb_y,
                              compute_dtype=jnp.float32)
    out_f32 = jax.block_until_ready(out_f32)

    # --- kernel, bf16 matmul-operand path (default: v6e/v7x MXU peak) --------
    out_bf16 = snpdfc3_forward(x, w1_sn, b1, w2_sn, b2, w7_sn, b7, emb_y,
                               compute_dtype=jnp.bfloat16)
    out_bf16 = jax.block_until_ready(out_bf16)

    # Pure-JAX f32 reference of the original (unfused) module math.
    h_r = x @ w1_sn.T + b1[None, :]
    h_r = jnp.where(h_r > 0, h_r, 0.2 * h_r)
    h_r = h_r @ w2_sn.T + b2[None, :]
    h_r = jnp.where(h_r > 0, h_r, 0.2 * h_r)
    ref_f32 = h_r @ w7_sn.T + b7[None, :] + jnp.sum(emb_y * h_r, axis=1,
                                                    keepdims=True)

    # Cast-matched bf16 reference (same operand rounding as the bf16 kernel).
    cd = jnp.bfloat16
    h_b = jnp.dot(x.astype(cd), w1_sn.astype(cd).T,
                  preferred_element_type=jnp.float32) + b1[None, :]
    h_b = jnp.where(h_b > 0, h_b, 0.2 * h_b)
    h_b = jnp.dot(h_b.astype(cd), w2_sn.astype(cd).T,
                  preferred_element_type=jnp.float32) + b2[None, :]
    h_b = jnp.where(h_b > 0, h_b, 0.2 * h_b)
    emb_plus_b = (emb_y + w7_sn).astype(cd).astype(jnp.float32)
    ref_bf16 = jnp.sum(emb_plus_b * h_b, axis=1, keepdims=True) + b7[None, :]

    assert out_f32.shape == (B, 1) and out_bf16.shape == (B, 1)
    assert jnp.allclose(out_f32, ref_f32, atol=1e-3, rtol=1e-3)
    assert jnp.allclose(out_bf16, ref_bf16, atol=2e-2, rtol=2e-2)

    print("KERNEL_OK")
</pallas_src>

<mosaic_0001>
module attributes {stable_mosaic.version = 11 : i64} {
  func.func @snpdfc3_kernel(%arg0: i32, %arg1: memref<128x128xf32, #tpu.memory_space<vmem>>, %arg2: memref<128x128xf32, #tpu.memory_space<vmem>>, %arg3: memref<128x1xf32, #tpu.memory_space<vmem>>, %arg4: memref<128x128xf32, #tpu.memory_space<vmem>>, %arg5: memref<128x1xf32, #tpu.memory_space<vmem>>, %arg6: memref<128x128xf32, #tpu.memory_space<vmem>>, %arg7: memref<1x1xf32, #tpu.memory_space<smem>>, %arg8: memref<1x128xf32, #tpu.memory_space<vmem>>) attributes {dimension_semantics = [#tpu.dimension_semantics<parallel>], iteration_bounds = array<i64: 2>, scalar_prefetch = 0 : i64, scratch_operands = 0 : i64, tpu.core_type = #tpu.core_type<tc>, window_params = [{transform_indices = @transform_0, window_bounds = array<i64: 128, 128>}, {pipeline_mode = #tpu.pipeline_mode<synchronous>, transform_indices = @transform_1, window_bounds = array<i64: 128, 128>}, {pipeline_mode = #tpu.pipeline_mode<synchronous>, transform_indices = @transform_2, window_bounds = array<i64: 128, 1>}, {pipeline_mode = #tpu.pipeline_mode<synchronous>, transform_indices = @transform_3, window_bounds = array<i64: 128, 128>}, {pipeline_mode = #tpu.pipeline_mode<synchronous>, transform_indices = @transform_4, window_bounds = array<i64: 128, 1>}, {transform_indices = @transform_5, window_bounds = array<i64: 128, 128>}, {transform_indices = @transform_6, window_bounds = array<i64: 1, 1>}, {transform_indices = @transform_7, window_bounds = array<i64: 1, 128>}]} {
    %c0 = arith.constant 0 : index
    %c0_0 = arith.constant 0 : index
    %0 = vector.load %arg2[%c0, %c0_0] : memref<128x128xf32, #tpu.memory_space<vmem>>, vector<128x128xf32>
    %c0_1 = arith.constant 0 : index
    %c0_2 = arith.constant 0 : index
    %1 = vector.load %arg1[%c0_1, %c0_2] : memref<128x128xf32, #tpu.memory_space<vmem>>, vector<128x128xf32>
    %cst = arith.constant dense<0.000000e+00> : vector<128x128xf32>
    %2 = tpu.matmul %0, %1, %cst {dimension_numbers = #tpu.dot_dimension_numbers<[1], [0], [0], [1], [0, 0, 1, 1], [], []>} : vector<128x128xf32>, vector<128x128xf32>, vector<128x128xf32> -> vector<128x128xf32>
    %c0_3 = arith.constant 0 : index
    %c0_4 = arith.constant 0 : index
    %3 = vector.load %arg3[%c0_3, %c0_4] : memref<128x1xf32, #tpu.memory_space<vmem>>, vector<128x1xf32>
    %4 = vector.broadcast %3 : vector<128x1xf32> to vector<128x128xf32>
    %5 = arith.addf %2, %4 : vector<128x128xf32>
    %cst_5 = arith.constant 0.000000e+00 : f32
    %6 = vector.broadcast %cst_5 : f32 to vector<128x128xf32>
    %7 = arith.cmpf ogt, %5, %6 : vector<128x128xf32>
    %cst_6 = arith.constant 2.000000e-01 : f32
    %8 = vector.broadcast %cst_6 : f32 to vector<128x128xf32>
    %9 = arith.mulf %8, %5 : vector<128x128xf32>
    %10 = arith.select %7, %5, %9 : vector<128x128xi1>, vector<128x128xf32>
    %c0_7 = arith.constant 0 : index
    %c0_8 = arith.constant 0 : index
    %11 = vector.load %arg4[%c0_7, %c0_8] : memref<128x128xf32, #tpu.memory_space<vmem>>, vector<128x128xf32>
    %cst_9 = arith.constant dense<0.000000e+00> : vector<128x128xf32>
    %12 = tpu.matmul %11, %10, %cst_9 {dimension_numbers = #tpu.dot_dimension_numbers<[1], [0], [0], [1], [0, 0, 1, 1], [], []>} : vector<128x128xf32>, vector<128x128xf32>, vector<128x128xf32> -> vector<128x128xf32>
    %c0_10 = arith.constant 0 : index
    %c0_11 = arith.constant 0 : index
    %13 = vector.load %arg5[%c0_10, %c0_11] : memref<128x1xf32, #tpu.memory_space<vmem>>, vector<128x1xf32>
    %14 = vector.broadcast %13 : vector<128x1xf32> to vector<128x128xf32>
    %15 = arith.addf %12, %14 : vector<128x128xf32>
    %cst_12 = arith.constant 0.000000e+00 : f32
    %16 = vector.broadcast %cst_12 : f32 to vector<128x128xf32>
    %17 = arith.cmpf ogt, %15, %16 : vector<128x128xf32>
    %cst_13 = arith.constant 2.000000e-01 : f32
    %18 = vector.broadcast %cst_13 : f32 to vector<128x128xf32>
    %19 = arith.mulf %18, %15 : vector<128x128xf32>
    %20 = arith.select %17, %15, %19 : vector<128x128xi1>, vector<128x128xf32>
    %c0_14 = arith.constant 0 : index
    %c0_15 = arith.constant 0 : index
    %21 = vector.load %arg6[%c0_14, %c0_15] : memref<128x128xf32, #tpu.memory_space<vmem>>, vector<128x128xf32>
    %22 = arith.mulf %20, %21 : vector<128x128xf32>
    %cst_16 = arith.constant dense<0.000000e+00> : vector<128xf32>
    %23 = vector.multi_reduction <add>, %22, %cst_16 [0] : vector<128x128xf32> to vector<128xf32>
    %24 = vector.shape_cast %23 : vector<128xf32> to vector<1x128xf32>
    %c0_17 = arith.constant 0 : index
    %c0_18 = arith.constant 0 : index
    %25 = memref.load %arg7[%c0_17, %c0_18] : memref<1x1xf32, #tpu.memory_space<smem>>
    %26 = vector.broadcast %25 : f32 to vector<1x128xf32>
    %27 = arith.addf %24, %26 : vector<1x128xf32>
    %c0_19 = arith.constant 0 : index
    %c0_20 = arith.constant 0 : index
    %28 = vector.load %arg8[%c0_19, %c0_20] : memref<1x128xf32, #tpu.memory_space<vmem>>, vector<1x128xf32>
    tpu.vector_store %arg8[%c0_19, %c0_20], %27 {strides = array<i32>} : memref<1x128xf32, #tpu.memory_space<vmem>>, vector<1x128xf32>,
    return
  }
  func.func @transform_0(%arg0: i32) -> (i32, i32) {
    %c0_i32 = arith.constant 0 : i32
    %c0_i32_0 = arith.constant 0 : i32
    return %c0_i32, %arg0 : i32, i32
  }
  func.func @transform_1(%arg0: i32) -> (i32, i32) {
    %c0_i32 = arith.constant 0 : i32
    %c0_i32_0 = arith.constant 0 : i32
    %c0_i32_1 = arith.constant 0 : i32
    return %c0_i32, %c0_i32_0 : i32, i32
  }
  func.func @transform_2(%arg0: i32) -> (i32, i32) {
    %c0_i32 = arith.constant 0 : i32
    %c0_i32_0 = arith.constant 0 : i32
    %c0_i32_1 = arith.constant 0 : i32
    return %c0_i32, %c0_i32_0 : i32, i32
  }
  func.func @transform_3(%arg0: i32) -> (i32, i32) {
    %c0_i32 = arith.constant 0 : i32
    %c0_i32_0 = arith.constant 0 : i32
    %c0_i32_1 = arith.constant 0 : i32
    return %c0_i32, %c0_i32_0 : i32, i32
  }
  func.func @transform_4(%arg0: i32) -> (i32, i32) {
    %c0_i32 = arith.constant 0 : i32
    %c0_i32_0 = arith.constant 0 : i32
    %c0_i32_1 = arith.constant 0 : i32
    return %c0_i32, %c0_i32_0 : i32, i32
  }
  func.func @transform_5(%arg0: i32) -> (i32, i32) {
    %c0_i32 = arith.constant 0 : i32
    %c0_i32_0 = arith.constant 0 : i32
    return %c0_i32, %arg0 : i32, i32
  }
  func.func @transform_6(%arg0: i32) -> (i32, i32) {
    %c0_i32 = arith.constant 0 : i32
    %c0_i32_0 = arith.constant 0 : i32
    %c0_i32_1 = arith.constant 0 : i32
    return %c0_i32, %c0_i32_0 : i32, i32
  }
  func.func @transform_7(%arg0: i32) -> (i32, i32) {
    %c0_i32 = arith.constant 0 : i32
    %c0_i32_0 = arith.constant 0 : i32
    return %c0_i32, %arg0 : i32, i32
  }
}

</mosaic_0001>

<llo_original>
// kernel: tpu_custom_call.1
$region0: #{tpu_custom_call.1}
  #allocation0 [shape = 'u32[]', space=smem, size = 0x4, offset = 0x4, fixed_abs, tag = 'smem constant byte address 0x4 - core index']
  #allocation1 [shape = 'u32[72,128]{1,0:T(1,128)}', space=vmem, size = 0x9000, scoped, tag = 'internal scratch']
  #allocation2 [shape = 'f32[1,1]{1,0:T(1,128)S(6)}', space=smem, size = 0x200, scoped, tag = 'scoped memory for tpu_custom_call.1']
  %s0 = inlined_call_operand.vmem [shape: f32[128,256], index: 0, kind: input, shape index: {}]
  %s1 = inlined_call_operand.hbm [shape: f32[128,128], index: 1, kind: input, shape index: {}]
  %s2 = inlined_call_operand.vmem [shape: f32[128,1], index: 2, kind: input, shape index: {}]
  %s3 = inlined_call_operand.hbm [shape: f32[128,128], index: 3, kind: input, shape index: {}]
  %s4 = inlined_call_operand.vmem [shape: f32[128,1], index: 4, kind: input, shape index: {}]
  %s5 = inlined_call_operand.hbm [shape: f32[128,256], index: 5, kind: input, shape index: {}]
  %s6 = inlined_call_operand.<no memory space> [shape: f32[1,1], index: 6, kind: input, shape index: {}]
  %s7 = inlined_call_operand.hbm [shape: f32[1,256], index: 7, kind: output, shape index: {}]
  %s8 = sld [smem:[#allocation0]]
  $region111: #{tpu_custom_call.1} parent=0
    _
  %s10 = ssub.s32 1, %s8
  %s11 = scalar_select 0, %s10, %s8
  %12 = sst [smem:[#allocation2]] %s6
  $region1: #{tpu_custom_call.1} parent=0
    #allocation3 [shape = 'u8[131072]{0}', space=vmem, size = 0x20000, scoped, tag = 'input window, operand 0']
    #allocation4 [shape = 'u8[65536]{0}', space=vmem, size = 0x10000, scoped, tag = 'input window, operand 1, single buffered']
    #allocation5 [shape = 's32[2]{0}', space=sflag, size = 0x8, scoped, tag = 'scoped memory for tpu_custom_call.1']
    #allocation6 [shape = 's32[2]{0}', space=sflag, size = 0x8, scoped, tag = 'scoped memory for tpu_custom_call.1']
    #allocation7 [shape = 'u8[65536]{0}', space=vmem, size = 0x10000, scoped, tag = 'input window, operand 3, single buffered']
    #allocation8 [shape = 's32[1]{0}', space=sflag, size = 0x4, scoped, tag = 'scoped memory for tpu_custom_call.1']
    #allocation9 [shape = 'u8[131072]{0}', space=vmem, size = 0x20000, scoped, tag = 'input window, operand 5']
    #allocation10 [shape = 'u8[1024]{0}', space=vmem, size = 0x400, scoped, tag = 'output window, operand 0']
    %13 = vsyncpa [#allocation5], 0
    %14 = vsyncpa [#allocation8], 0
    %15 = vsyncpa [#allocation6], 0
    %s16 = scalar_lea.sflag [#allocation6], 1
    %17 = vsyncpa %s16, 0
    loop: start=0, step=1, limit=4
    $region2: #{tpu_custom_call.1} parent=1 // loop_pre_header
      _
    $region3: #{tpu_custom_call.1} parent=1 // loop_header
      %s19 = sphi 0, %s23
      %p20 = scmp.ge.s32.totalorder %s19, 4
      %s29 = sphi 0, %s31
      %s32 = sphi 0, %s29
      %s33 = sphi 0, %s32
      %s49 = sphi 0, %s33
      %s53 = sphi 0, %s53
      %s55 = sphi 0, %s53
      %s56 = sphi 0, %s55
      %s70 = sphi 0, %s56
      %s74 = sphi 0, %s74
      %s76 = sphi 0, %s74
      %s77 = sphi 0, %s76
      %s91 = sphi 0, %s77
      %s95 = sphi 0, %s95
      %s97 = sphi 0, %s95
      %s98 = sphi 0, %s97
      %s112 = sphi 0, %s98
      %s116 = sphi 0, %s116
      %s118 = sphi 0, %s116
      %s119 = sphi 0, %s118
      %s133 = sphi 0, %s119
      %s139 = sphi 0, %s141
      %s142 = sphi 0, %s139
      %s143 = sphi 0, %s142
      %s159 = sphi 0, %s143
      %s163 = sphi 0, %s163
      %s165 = sphi 0, %s163
      %s166 = sphi 0, %s165
      %s180 = sphi 0, %s166
      %s186 = sphi 0, %s188
      %s189 = sphi 0, %s186
      %s190 = sphi 0, %s189
      %s206 = sphi 0, %s190
    $region4: #{tpu_custom_call.1} parent=1 // loop_header_branch
      %22 = sbr.rel (%p20) target = $region8
    $region5: #{tpu_custom_call.1} parent=1 // loop_body
      %s24 = ssub.s32 %s19, 1
      %s25 = ssub.s32 %s19, 2
      %s26 = sadd.s32 %s19, 1
      %s27 = ssub.s32 %s19, %s26
      %p28 = scmp.eq.s32.totalorder %s27, 0
      %s30 = sadd.s32 %s29, 1
      %s31 = scalar_select %p28, %s29, %s30
      %p34 = pneg %p28
      %p35 = scmp.eq.s32.totalorder %s19, 1
      %p36 = por %p34, %p35
      %p37 = scmp.ne.s32.totalorder %s29, %s32
      %p38 = scmp.eq.s32.totalorder %s19, 0
      %p39 = por %p37, %p38
      %p40 = scmp.ne.s32.totalorder %s29, %s32
      %p41 = scmp.eq.s32.totalorder %s24, 1
      %p42 = por %p40, %p41
      %p43 = scmp.ne.s32.totalorder %s32, %s33
      %p44 = scmp.eq.s32.totalorder %s24, 0
      %p45 = por %p43, %p44
      %p46 = scmp.ne.s32.totalorder %s32, %s33
      %p47 = scmp.eq.s32.totalorder %s25, 1
      %p48 = por %p46, %p47
      %p50 = scmp.ne.s32.totalorder %s33, %s49
      %p51 = scmp.eq.s32.totalorder %s25, 0
      %p52 = por %p50, %p51
      %s54 = sadd.s32 %s53, 1
      %p57 = scmp.eq.s32.totalorder %s19, 1
      %p58 = scmp.ne.s32.totalorder %s53, %s55
      %p59 = scmp.eq.s32.totalorder %s19, 0
      %p60 = por %p58, %p59
      %p61 = scmp.ne.s32.totalorder %s53, %s55
      %p62 = scmp.eq.s32.totalorder %s24, 1
      %p63 = por %p61, %p62
      %p64 = scmp.ne.s32.totalorder %s55, %s56
      %p65 = scmp.eq.s32.totalorder %s24, 0
      %p66 = por %p64, %p65
      %p67 = scmp.ne.s32.totalorder %s55, %s56
      %p68 = scmp.eq.s32.totalorder %s25, 1
      %p69 = por %p67, %p68
      %p71 = scmp.ne.s32.totalorder %s56, %s70
      %p72 = scmp.eq.s32.totalorder %s25, 0
      %p73 = por %p71, %p72
      %s75 = sadd.s32 %s74, 1
      %p78 = scmp.eq.s32.totalorder %s19, 1
      %p79 = scmp.ne.s32.totalorder %s74, %s76
      %p80 = scmp.eq.s32.totalorder %s19, 0
      %p81 = por %p79, %p80
      %p82 = scmp.ne.s32.totalorder %s74, %s76
      %p83 = scmp.eq.s32.totalorder %s24, 1
      %p84 = por %p82, %p83
      %p85 = scmp.ne.s32.totalorder %s76, %s77
      %p86 = scmp.eq.s32.totalorder %s24, 0
      %p87 = por %p85, %p86
      %p88 = scmp.ne.s32.totalorder %s76, %s77
      %p89 = scmp.eq.s32.totalorder %s25, 1
      %p90 = por %p88, %p89
      %p92 = scmp.ne.s32.totalorder %s77, %s91
      %p93 = scmp.eq.s32.totalorder %s25, 0
      %p94 = por %p92, %p93
      %s96 = sadd.s32 %s95, 1
      %p99 = scmp.eq.s32.totalorder %s19, 1
      %p100 = scmp.ne.s32.totalorder %s95, %s97
      %p101 = scmp.eq.s32.totalorder %s19, 0
      %p102 = por %p100, %p101
      %p103 = scmp.ne.s32.totalorder %s95, %s97
      %p104 = scmp.eq.s32.totalorder %s24, 1
      %p105 = por %p103, %p104
      %p106 = scmp.ne.s32.totalorder %s97, %s98
      %p107 = scmp.eq.s32.totalorder %s24, 0
      %p108 = por %p106, %p107
      %p109 = scmp.ne.s32.totalorder %s97, %s98
      %p110 = scmp.eq.s32.totalorder %s25, 1
      %p111 = por %p109, %p110
      %p113 = scmp.ne.s32.totalorder %s98, %s112
      %p114 = scmp.eq.s32.totalorder %s25, 0
      %p115 = por %p113, %p114
      %s117 = sadd.s32 %s116, 1
      %p120 = scmp.eq.s32.totalorder %s19, 1
      %p121 = scmp.ne.s32.totalorder %s116, %s118
      %p122 = scmp.eq.s32.totalorder %s19, 0
      %p123 = por %p121, %p122
      %p124 = scmp.ne.s32.totalorder %s116, %s118
      %p125 = scmp.eq.s32.totalorder %s24, 1
      %p126 = por %p124, %p125
      %p127 = scmp.ne.s32.totalorder %s118, %s119
      %p128 = scmp.eq.s32.totalorder %s24, 0
      %p129 = por %p127, %p128
      %p130 = scmp.ne.s32.totalorder %s118, %s119
      %p131 = scmp.eq.s32.totalorder %s25, 1
      %p132 = por %p130, %p131
      %p134 = scmp.ne.s32.totalorder %s119, %s133
      %p135 = scmp.eq.s32.totalorder %s25, 0
      %p136 = por %p134, %p135
      %s137 = ssub.s32 %s19, %s26
      %p138 = scmp.eq.s32.totalorder %s137, 0
      %s140 = sadd.s32 %s139, 1
      %s141 = scalar_select %p138, %s139, %s140
      %p144 = pneg %p138
      %p145 = scmp.eq.s32.totalorder %s19, 1
      %p146 = por %p144, %p145
      %p147 = scmp.ne.s32.totalorder %s139, %s142
      %p148 = scmp.eq.s32.totalorder %s19, 0
      %p149 = por %p147, %p148
      %p150 = scmp.ne.s32.totalorder %s139, %s142
      %p151 = scmp.eq.s32.totalorder %s24, 1
      %p152 = por %p150, %p151
      %p153 = scmp.ne.s32.totalorder %s142, %s143
      %p154 = scmp.eq.s32.totalorder %s24, 0
      %p155 = por %p153, %p154
      %p156 = scmp.ne.s32.totalorder %s142, %s143
      %p157 = scmp.eq.s32.totalorder %s25, 1
      %p158 = por %p156, %p157
      %p160 = scmp.ne.s32.totalorder %s143, %s159
      %p161 = scmp.eq.s32.totalorder %s25, 0
      %p162 = por %p160, %p161
      %s164 = sadd.s32 %s163, 1
      %p167 = scmp.eq.s32.totalorder %s19, 1
      %p168 = scmp.ne.s32.totalorder %s163, %s165
      %p169 = scmp.eq.s32.totalorder %s19, 0
      %p170 = por %p168, %p169
      %p171 = scmp.ne.s32.totalorder %s163, %s165
      %p172 = scmp.eq.s32.totalorder %s24, 1
      %p173 = por %p171, %p172
      %p174 = scmp.ne.s32.totalorder %s165, %s166
      %p175 = scmp.eq.s32.totalorder %s24, 0
      %p176 = por %p174, %p175
      %p177 = scmp.ne.s32.totalorder %s165, %s166
      %p178 = scmp.eq.s32.totalorder %s25, 1
      %p179 = por %p177, %p178
      %p181 = scmp.ne.s32.totalorder %s166, %s180
      %p182 = scmp.eq.s32.totalorder %s25, 0
      %p183 = por %p181, %p182
      %s184 = ssub.s32 %s19, %s26
      %p185 = scmp.eq.s32.totalorder %s184, 0
      %s187 = sadd.s32 %s186, 1
      %s188 = scalar_select %p185, %s186, %s187
      %p191 = pneg %p185
      %p192 = scmp.eq.s32.totalorder %s19, 1
      %p193 = por %p191, %p192
      %p194 = scmp.ne.s32.totalorder %s186, %s189
      %p195 = scmp.eq.s32.totalorder %s19, 0
      %p196 = por %p194, %p195
      %p197 = scmp.ne.s32.totalorder %s186, %s189
      %p198 = scmp.eq.s32.totalorder %s24, 1
      %p199 = por %p197, %p198
      %p200 = scmp.ne.s32.totalorder %s189, %s190
      %p201 = scmp.eq.s32.totalorder %s24, 0
      %p202 = por %p200, %p201
      %p203 = scmp.ne.s32.totalorder %s189, %s190
      %p204 = scmp.eq.s32.totalorder %s25, 1
      %p205 = por %p203, %p204
      %p207 = scmp.ne.s32.totalorder %s190, %s206
      %p208 = scmp.eq.s32.totalorder %s25, 0
      %p209 = por %p207, %p208
      %p210 = scmp.le.s32.totalorder 1, %s19
      %p211 = scmp.lt.s32.totalorder %s19, 3
      %p212 = pnand %p210, %p211
      %p213 = pneg %p212
      // Predicated region
      $region9: #{tpu_custom_call.1} parent=5 // pred_check
        _
      $region10: #{tpu_custom_call.1} parent=5 // pred_check_branch
        %215 = sbr.rel (%p212) target = $region12
      $region11: #{tpu_custom_call.1} parent=5 // pred_region
        %s216 = ssub.s32 %s19, 1
        // Predicated region
        $region13: #{tpu_custom_call.1} parent=11 // pred_check
          %p217 = pneg %p66
        $region14: #{tpu_custom_call.1} parent=11 // pred_check_branch
          %219 = sbr.rel (%p217) target = $region16
        $region15: #{tpu_custom_call.1} parent=11 // pred_region
          %221 = vsyncadd [#allocation5], 0
          %s222 = sshll.u32 %s1, 4
          %s223 = int_to_ptr.hbm [resolvable:$true] %s222
          %s224 = sshll.u32 [#allocation4], 4
          %s225 = int_to_ptr.vmem [resolvable:$true] %s224
          %230 = dma.hbm_to_vmem [thread:$0]  %s223, 2048, %s225, [#allocation5], 128, 128, 8
        $region16: #{tpu_custom_call.1} parent=11 // pred_fallthru
          _
        // Predicated region
        $region17: #{tpu_custom_call.1} parent=11 // pred_check
          %p231 = pneg %p87
        $region18: #{tpu_custom_call.1} parent=11 // pred_check_branch
          %233 = sbr.rel (%p231) target = $region20
        $region19: #{tpu_custom_call.1} parent=11 // pred_region
          _
        $region20: #{tpu_custom_call.1} parent=11 // pred_fallthru
          _
        // Predicated region
        $region21: #{tpu_custom_call.1} parent=11 // pred_check
          %p234 = pneg %p108
        $region22: #{tpu_custom_call.1} parent=11 // pred_check_branch
          %236 = sbr.rel (%p234) target = $region24
        $region23: #{tpu_custom_call.1} parent=11 // pred_region
          %238 = vsyncadd [#allocation8], 0
          %s239 = sshll.u32 %s3, 4
          %s240 = int_to_ptr.hbm [resolvable:$true] %s239
          %s241 = sshll.u32 [#allocation7], 4
          %s242 = int_to_ptr.vmem [resolvable:$true] %s241
          %247 = dma.hbm_to_vmem [thread:$0]  %s240, 2048, %s242, [#allocation8], 128, 128, 8
        $region24: #{tpu_custom_call.1} parent=11 // pred_fallthru
          _
        // Predicated region
        $region25: #{tpu_custom_call.1} parent=11 // pred_check
          %p248 = pneg %p129
        $region26: #{tpu_custom_call.1} parent=11 // pred_check_branch
          %250 = sbr.rel (%p248) target = $region28
        $region27: #{tpu_custom_call.1} parent=11 // pred_region
          _
        $region28: #{tpu_custom_call.1} parent=11 // pred_fallthru
          _
        // Predicated region
        $region29: #{tpu_custom_call.1} parent=11 // pred_check
          %p251 = pneg %p176
        $region30: #{tpu_custom_call.1} parent=11 // pred_check_branch
          %253 = sbr.rel (%p251) target = $region32
        $region31: #{tpu_custom_call.1} parent=11 // pred_region
          _
        $region32: #{tpu_custom_call.1} parent=11 // pred_fallthru
          _
      $region12: #{tpu_custom_call.1} parent=5 // pred_fallthru
        _
      %p254 = scmp.lt.s32.totalorder %s19, 2
      // Predicated region
      $region33: #{tpu_custom_call.1} parent=5 // pred_check
        %p255 = pneg %p254
      $region34: #{tpu_custom_call.1} parent=5 // pred_check_branch
        %257 = sbr.rel (%p255) target = $region36
      $region35: #{tpu_custom_call.1} parent=5 // pred_region
        // Predicated region
        $region37: #{tpu_custom_call.1} parent=35 // pred_check
          %p258 = pneg %p39
        $region38: #{tpu_custom_call.1} parent=35 // pred_check_branch
          %260 = sbr.rel (%p258) target = $region40
        $region39: #{tpu_custom_call.1} parent=35 // pred_region
          %s261 = sand.u32 %s29, 1
          %s262 = sand.u32 %s29, 1
          %s263 = smul.addr %s262, 128
          %s264 = scalar_lea.vmem [#allocation3], %s263
          %s265 = smul.addr %s19, 8
          %s266 = scalar_lea.vmem %s0, %s265
          // Predicated region
          $region41: #{tpu_custom_call.1} parent=39 // pred_check
            _
          $region42: #{tpu_custom_call.1} parent=39 // pred_check_branch
            %268 = sbr.rel (0) target = $region44
          $region43: #{tpu_custom_call.1} parent=39 // pred_region
            // Predicated region
            $region45: #{tpu_custom_call.1} parent=43 // pred_check
              _
            $region46: #{tpu_custom_call.1} parent=43 // pred_check_branch
              %270 = sbr.rel (0) target = $region48
            $region47: #{tpu_custom_call.1} parent=43 // pred_region
              // Predicated region
              $region60: #{tpu_custom_call.1} parent=47 // pred_check
                _
              $region61: #{tpu_custom_call.1} parent=47 // pred_check_branch
                %316 = sbr.rel (0) target = $region63
              $region62: #{tpu_custom_call.1} parent=47 // pred_region
                loop: start=0, step=1, limit=1
                $region64: #{tpu_custom_call.1} parent=62 // loop_pre_header
                  _
                $region65: #{tpu_custom_call.1} parent=62 // loop_header
                  %s318 = sphi 0, %s322
                  %p319 = scmp.ge.s32.totalorder %s318, 1
                  %s323 = sphi %s266, %s266
                  %s324 = sphi %s264, %s264
                $region66: #{tpu_custom_call.1} parent=62 // loop_header_branch
                  %321 = sbr.rel (%p319) target = $region70
                $region67: #{tpu_custom_call.1} parent=62 // loop_body
                  %v325 = vld [vmem:[%s323] sm:$0xff]
                  %326 = vst [vmem:[%s324] sm:$0xff] %v325
                  %v327 = vld [vmem:[%s323 + $0x10] sm:$0xff]
                  %328 = vst [vmem:[%s324 + $0x8] sm:$0xff] %v327
                  %v329 = vld [vmem:[%s323 + $0x20] sm:$0xff]
                  %330 = vst [vmem:[%s324 + $0x10] sm:$0xff] %v329
                  %v331 = vld [vmem:[%s323 + $0x30] sm:$0xff]
                  %332 = vst [vmem:[%s324 + $0x18] sm:$0xff] %v331
                  %v333 = vld [vmem:[%s323 + $0x40] sm:$0xff]
                  %334 = vst [vmem:[%s324 + $0x20] sm:$0xff] %v333
                  %v335 = vld [vmem:[%s323 + $0x50] sm:$0xff]
                  %336 = vst [vmem:[%s324 + $0x28] sm:$0xff] %v335
                  %v337 = vld [vmem:[%s323 + $0x60] sm:$0xff]
                  %338 = vst [vmem:[%s324 + $0x30] sm:$0xff] %v337
                  %v339 = vld [vmem:[%s323 + $0x70] sm:$0xff]
                  %340 = vst [vmem:[%s324 + $0x38] sm:$0xff] %v339
                  %v341 = vld [vmem:[%s323 + $0x80] sm:$0xff]
                  %342 = vst [vmem:[%s324 + $0x40] sm:$0xff] %v341
                  %v343 = vld [vmem:[%s323 + $0x90] sm:$0xff]
                  %344 = vst [vmem:[%s324 + $0x48] sm:$0xff] %v343
                  %v345 = vld [vmem:[%s323 + $0xa0] sm:$0xff]
                  %346 = vst [vmem:[%s324 + $0x50] sm:$0xff] %v345
                  %v347 = vld [vmem:[%s323 + $0xb0] sm:$0xff]
                  %348 = vst [vmem:[%s324 + $0x58] sm:$0xff] %v347
                  %v349 = vld [vmem:[%s323 + $0xc0] sm:$0xff]
                  %350 = vst [vmem:[%s324 + $0x60] sm:$0xff] %v349
                  %v351 = vld [vmem:[%s323 + $0xd0] sm:$0xff]
                  %352 = vst [vmem:[%s324 + $0x68] sm:$0xff] %v351
                  %v353 = vld [vmem:[%s323 + $0xe0] sm:$0xff]
                  %354 = vst [vmem:[%s324 + $0x70] sm:$0xff] %v353
                  %v355 = vld [vmem:[%s323 + $0xf0] sm:$0xff]
                  %356 = vst [vmem:[%s324 + $0x78] sm:$0xff] %v355
                $region68: #{tpu_custom_call.1} parent=62 // loop_footer
                  %s322 = sadd.s32 1, %s318
                $region69: #{tpu_custom_call.1} parent=62 // loop_footer_branch
                  %317 = sbr.rel target = $region65
                $region70: #{tpu_custom_call.1} parent=62 // loop_exit
                  _
              $region63: #{tpu_custom_call.1} parent=47 // pred_fallthru
                _
              // Predicated region
              $region71: #{tpu_custom_call.1} parent=47 // pred_check
                _
              $region72: #{tpu_custom_call.1} parent=47 // pred_check_branch
                %358 = sbr.rel target = $region74
              $region73: #{tpu_custom_call.1} parent=47 // pred_region
                _
              $region74: #{tpu_custom_call.1} parent=47 // pred_fallthru
                _
            $region48: #{tpu_custom_call.1} parent=43 // pred_fallthru
              _
            // Predicated region
            $region49: #{tpu_custom_call.1} parent=43 // pred_check
              _
            $region50: #{tpu_custom_call.1} parent=43 // pred_check_branch
              %272 = sbr.rel target = $region52
            $region51: #{tpu_custom_call.1} parent=43 // pred_region
              %s274 = ssub.s32 256, 1
              loop: start=0, step=1, limit=1
              $region53: #{tpu_custom_call.1} parent=51 // loop_pre_header
                _
              $region54: #{tpu_custom_call.1} parent=51 // loop_header
                %s276 = sphi 0, %s280
                %p277 = scmp.ge.s32.totalorder %s276, 1
                %s281 = sphi %s266, %s266
                %s282 = sphi %s264, %s264
              $region55: #{tpu_custom_call.1} parent=51 // loop_header_branch
                %279 = sbr.rel (%p277) target = $region59
              $region56: #{tpu_custom_call.1} parent=51 // loop_body
                %v283 = vld [vmem:[%s281] sm:%s274]
                %284 = vst [vmem:[%s282] sm:%s274] %v283
                %v285 = vld [vmem:[%s281 + $0x10] sm:%s274]
                %286 = vst [vmem:[%s282 + $0x8] sm:%s274] %v285
                %v287 = vld [vmem:[%s281 + $0x20] sm:%s274]
                %288 = vst [vmem:[%s282 + $0x10] sm:%s274] %v287
                %v289 = vld [vmem:[%s281 + $0x30] sm:%s274]
                %290 = vst [vmem:[%s282 + $0x18] sm:%s274] %v289
                %v291 = vld [vmem:[%s281 + $0x40] sm:%s274]
                %292 = vst [vmem:[%s282 + $0x20] sm:%s274] %v291
                %v293 = vld [vmem:[%s281 + $0x50] sm:%s274]
                %294 = vst [vmem:[%s282 + $0x28] sm:%s274] %v293
                %v295 = vld [vmem:[%s281 + $0x60] sm:%s274]
                %296 = vst [vmem:[%s282 + $0x30] sm:%s274] %v295
                %v297 = vld [vmem:[%s281 + $0x70] sm:%s274]
                %298 = vst [vmem:[%s282 + $0x38] sm:%s274] %v297
                %v299 = vld [vmem:[%s281 + $0x80] sm:%s274]
                %300 = vst [vmem:[%s282 + $0x40] sm:%s274] %v299
                %v301 = vld [vmem:[%s281 + $0x90] sm:%s274]
                %302 = vst [vmem:[%s282 + $0x48] sm:%s274] %v301
                %v303 = vld [vmem:[%s281 + $0xa0] sm:%s274]
                %304 = vst [vmem:[%s282 + $0x50] sm:%s274] %v303
                %v305 = vld [vmem:[%s281 + $0xb0] sm:%s274]
                %306 = vst [vmem:[%s282 + $0x58] sm:%s274] %v305
                %v307 = vld [vmem:[%s281 + $0xc0] sm:%s274]
                %308 = vst [vmem:[%s282 + $0x60] sm:%s274] %v307
                %v309 = vld [vmem:[%s281 + $0xd0] sm:%s274]
                %310 = vst [vmem:[%s282 + $0x68] sm:%s274] %v309
                %v311 = vld [vmem:[%s281 + $0xe0] sm:%s274]
                %312 = vst [vmem:[%s282 + $0x70] sm:%s274] %v311
                %v313 = vld [vmem:[%s281 + $0xf0] sm:%s274]
                %314 = vst [vmem:[%s282 + $0x78] sm:%s274] %v313
              $region57: #{tpu_custom_call.1} parent=51 // loop_footer
                %s280 = sadd.s32 1, %s276
              $region58: #{tpu_custom_call.1} parent=51 // loop_footer_branch
                %275 = sbr.rel target = $region54
              $region59: #{tpu_custom_call.1} parent=51 // loop_exit
                _
            $region52: #{tpu_custom_call.1} parent=43 // pred_fallthru
              _
          $region44: #{tpu_custom_call.1} parent=39 // pred_fallthru
            _
          %359 = vnop
        $region40: #{tpu_custom_call.1} parent=35 // pred_fallthru
          _
        // Predicated region
        $region75: #{tpu_custom_call.1} parent=35 // pred_check
          %p360 = pneg %p149
        $region76: #{tpu_custom_call.1} parent=35 // pred_check_branch
          %362 = sbr.rel (%p360) target = $region78
        $region77: #{tpu_custom_call.1} parent=35 // pred_region
          %s363 = sand.u32 %s19, 1
          %s364 = scalar_lea.sflag [#allocation5], %s363
          %s365 = sand.u32 %s139, 1
          %s366 = smul.addr %s365, 128
          %s367 = scalar_lea.vmem [#allocation9], %s366
          %369 = vsyncadd %s364, 0
          %s370 = smul.addr %s19, 8
          %s371 = scalar_lea.hbm %s5, %s370
          %s372 = sshll.u32 %s371, 4
          %s373 = int_to_ptr.hbm [resolvable:$true] %s372
          %s374 = sshll.u32 %s367, 4
          %s375 = int_to_ptr.vmem [resolvable:$true] %s374
          %380 = dma.hbm_to_vmem [thread:$0]  %s373, 2048, %s375, %s364, 256, 128, 8
        $region78: #{tpu_custom_call.1} parent=35 // pred_fallthru
          _
      $region36: #{tpu_custom_call.1} parent=5 // pred_fallthru
        _
      %p381 = scmp.le.s32.totalorder 1, %s19
      %p382 = scmp.lt.s32.totalorder %s19, 3
      %p383 = pnand %p381, %p382
      %p384 = pneg %p383
      // Predicated region
      $region79: #{tpu_custom_call.1} parent=5 // pred_check
        _
      $region80: #{tpu_custom_call.1} parent=5 // pred_check_branch
        %386 = sbr.rel (%p383) target = $region82
      $region81: #{tpu_custom_call.1} parent=5 // pred_region
        %s387 = ssub.s32 %s19, 1
        %s388 = sand.u32 %s32, 1
        %s389 = sand.u32 %s32, 1
        %s390 = smul.addr %s389, 128
        %s391 = scalar_lea.vmem [#allocation3], %s390
        // Predicated region
        $region83: #{tpu_custom_call.1} parent=81 // pred_check
          %p392 = pneg %p45
        $region84: #{tpu_custom_call.1} parent=81 // pred_check_branch
          %394 = sbr.rel (%p392) target = $region86
        $region85: #{tpu_custom_call.1} parent=81 // pred_region
          _
        $region86: #{tpu_custom_call.1} parent=81 // pred_fallthru
          _
        // Predicated region
        $region87: #{tpu_custom_call.1} parent=81 // pred_check
          %p395 = pneg %p66
        $region88: #{tpu_custom_call.1} parent=81 // pred_check_branch
          %397 = sbr.rel (%p395) target = $region90
        $region89: #{tpu_custom_call.1} parent=81 // pred_region
          %399 = dma.done [#allocation5], 2048
        $region90: #{tpu_custom_call.1} parent=81 // pred_fallthru
          _
        // Predicated region
        $region91: #{tpu_custom_call.1} parent=81 // pred_check
          %p400 = pneg %p108
        $region92: #{tpu_custom_call.1} parent=81 // pred_check_branch
          %402 = sbr.rel (%p400) target = $region94
        $region93: #{tpu_custom_call.1} parent=81 // pred_region
          %404 = dma.done [#allocation8], 2048
        $region94: #{tpu_custom_call.1} parent=81 // pred_fallthru
          _
        %s405 = sand.u32 %s24, 1
        %s406 = scalar_lea.sflag [#allocation5], %s405
        %s407 = sand.u32 %s142, 1
        %s408 = smul.addr %s407, 128
        %s409 = scalar_lea.vmem [#allocation9], %s408
        // Predicated region
        $region95: #{tpu_custom_call.1} parent=81 // pred_check
          %p410 = pneg %p155
        $region96: #{tpu_custom_call.1} parent=81 // pred_check_branch
          %412 = sbr.rel (%p410) target = $region98
        $region97: #{tpu_custom_call.1} parent=81 // pred_region
          %414 = dma.done %s406, 2048
        $region98: #{tpu_custom_call.1} parent=81 // pred_fallthru
          _
        %s415 = sand.u32 %s32, 1
        %s416 = sand.u32 %s32, 1
        %s417 = smul.addr %s416, 128
        %s418 = scalar_lea.vmem [#allocation3], %s417
        %p419 = pneg %p45
        %p420 = pneg %p42
        %p421 = pneg %p66
        %p422 = pneg %p63
        %p423 = pneg %p87
        %p424 = pneg %p84
        %p425 = pneg %p108
        %p426 = pneg %p105
        %p427 = pneg %p129
        %p428 = pneg %p126
        %s429 = sand.u32 %s24, 1
        %s430 = scalar_lea.sflag [#allocation5], %s429
        %s431 = sand.u32 %s142, 1
        %s432 = smul.addr %s431, 128
        %s433 = scalar_lea.vmem [#allocation9], %s432
        %p434 = pneg %p155
        %p435 = pneg %p152
        %p436 = pneg %p176
        %p437 = pneg %p173
        %p438 = pneg %p202
        %p439 = pneg %p199
        %s440 = sand.u32 %s189, 1
        %s441 = scalar_lea.sflag [#allocation6], %s440
        %s442 = sand.u32 %s189, 1
        %s443 = scalar_lea.vmem [#allocation10], %s442
        %v444 = vld [vmem:[#allocation4] sm:$0xff]
        %v445 = vld [vmem:[#allocation4 + $0x8] sm:$0xff]
        %v446 = vld [vmem:[#allocation4 + $0x10] sm:$0xff]
        %v447 = vld [vmem:[#allocation4 + $0x18] sm:$0xff]
        %v448 = vld [vmem:[#allocation4 + $0x20] sm:$0xff]
        %v449 = vld [vmem:[#allocation4 + $0x28] sm:$0xff]
        %v450 = vld [vmem:[#allocation4 + $0x30] sm:$0xff]
        %v451 = vld [vmem:[#allocation4 + $0x38] sm:$0xff]
        %v452 = vld [vmem:[#allocation4 + $0x40] sm:$0xff]
        %v453 = vld [vmem:[#allocation4 + $0x48] sm:$0xff]
        %v454 = vld [vmem:[#allocation4 + $0x50] sm:$0xff]
        %v455 = vld [vmem:[#allocation4 + $0x58] sm:$0xff]
        %v456 = vld [vmem:[#allocation4 + $0x60] sm:$0xff]
        %v457 = vld [vmem:[#allocation4 + $0x68] sm:$0xff]
        %v458 = vld [vmem:[#allocation4 + $0x70] sm:$0xff]
        %v459 = vld [vmem:[#allocation4 + $0x78] sm:$0xff]
        %v460 = vld [vmem:[%s391] sm:$0xff]
        %v461 = vld [vmem:[%s391 + $0x8] sm:$0xff]
        %v462 = vld [vmem:[%s391 + $0x10] sm:$0xff]
        %v463 = vld [vmem:[%s391 + $0x18] sm:$0xff]
        %v464 = vld [vmem:[%s391 + $0x20] sm:$0xff]
        %v465 = vld [vmem:[%s391 + $0x28] sm:$0xff]
        %v466 = vld [vmem:[%s391 + $0x30] sm:$0xff]
        %v467 = vld [vmem:[%s391 + $0x38] sm:$0xff]
        %v468 = vld [vmem:[%s391 + $0x40] sm:$0xff]
        %v469 = vld [vmem:[%s391 + $0x48] sm:$0xff]
        %v470 = vld [vmem:[%s391 + $0x50] sm:$0xff]
        %v471 = vld [vmem:[%s391 + $0x58] sm:$0xff]
        %v472 = vld [vmem:[%s391 + $0x60] sm:$0xff]
        %v473 = vld [vmem:[%s391 + $0x68] sm:$0xff]
        %v474 = vld [vmem:[%s391 + $0x70] sm:$0xff]
        %v475 = vld [vmem:[%s391 + $0x78] sm:$0xff]
        %v476 = vld [vmem:[%s2] sm:$0xff]
        %v477 = vld [vmem:[%s2 + $0x8] sm:$0xff]
        %v478 = vld [vmem:[%s2 + $0x10] sm:$0xff]
        %v479 = vld [vmem:[%s2 + $0x18] sm:$0xff]
        %v480 = vld [vmem:[%s2 + $0x20] sm:$0xff]
        %v481 = vld [vmem:[%s2 + $0x28] sm:$0xff]
        %v482 = vld [vmem:[%s2 + $0x30] sm:$0xff]
        %v483 = vld [vmem:[%s2 + $0x38] sm:$0xff]
        %v484 = vld [vmem:[%s2 + $0x40] sm:$0xff]
        %v485 = vld [vmem:[%s2 + $0x48] sm:$0xff]
        %v486 = vld [vmem:[%s2 + $0x50] sm:$0xff]
        %v487 = vld [vmem:[%s2 + $0x58] sm:$0xff]
        %v488 = vld [vmem:[%s2 + $0x60] sm:$0xff]
        %v489 = vld [vmem:[%s2 + $0x68] sm:$0xff]
        %v490 = vld [vmem:[%s2 + $0x70] sm:$0xff]
        %v491 = vld [vmem:[%s2 + $0x78] sm:$0xff]
        %493 = vset.pattern.permute.xlu0 0
        %494 = vperm.xlu0 %493, %v476
        %v495 = vpop.permute.xlu0 %494
        %498 = vset.pattern.permute.xlu0 0
        %499 = vperm.xlu0 %498, %v477
        %v500 = vpop.permute.xlu0 %499
        %503 = vset.pattern.permute.xlu0 0
        %504 = vperm.xlu0 %503, %v478
        %v505 = vpop.permute.xlu0 %504
        %508 = vset.pattern.permute.xlu0 0
        %509 = vperm.xlu0 %508, %v479
        %v510 = vpop.permute.xlu0 %509
        %513 = vset.pattern.permute.xlu0 0
        %514 = vperm.xlu0 %513, %v480
        %v515 = vpop.permute.xlu0 %514
        %518 = vset.pattern.permute.xlu0 0
        %519 = vperm.xlu0 %518, %v481
        %v520 = vpop.permute.xlu0 %519
        %523 = vset.pattern.permute.xlu0 0
        %524 = vperm.xlu0 %523, %v482
        %v525 = vpop.permute.xlu0 %524
        %528 = vset.pattern.permute.xlu0 0
        %529 = vperm.xlu0 %528, %v483
        %v530 = vpop.permute.xlu0 %529
        %533 = vset.pattern.permute.xlu0 0
        %534 = vperm.xlu0 %533, %v484
        %v535 = vpop.permute.xlu0 %534
        %538 = vset.pattern.permute.xlu0 0
        %539 = vperm.xlu0 %538, %v485
        %v540 = vpop.permute.xlu0 %539
        %543 = vset.pattern.permute.xlu0 0
        %544 = vperm.xlu0 %543, %v486
        %v545 = vpop.permute.xlu0 %544
        %548 = vset.pattern.permute.xlu0 0
        %549 = vperm.xlu0 %548, %v487
        %v550 = vpop.permute.xlu0 %549
        %553 = vset.pattern.permute.xlu0 0
        %554 = vperm.xlu0 %553, %v488
        %v555 = vpop.permute.xlu0 %554
        %558 = vset.pattern.permute.xlu0 0
        %559 = vperm.xlu0 %558, %v489
        %v560 = vpop.permute.xlu0 %559
        %563 = vset.pattern.permute.xlu0 0
        %564 = vperm.xlu0 %563, %v490
        %v565 = vpop.permute.xlu0 %564
        %568 = vset.pattern.permute.xlu0 0
        %569 = vperm.xlu0 %568, %v491
        %v570 = vpop.permute.xlu0 %569
        %572 = vmatpush.msra.mxu0 %v475
        %573 = vmatpush.msra.mxu0 %v474
        %574 = vmatpush.msra.mxu0 %v473
        %575 = vmatpush.msra.mxu0 %v472
        %576 = vmatpush.msra.mxu0 %v471
        %577 = vmatpush.msra.mxu0 %v470
        %578 = vmatpush.msra.mxu0 %v469
        %579 = vmatpush.msra.mxu0 %v468
        %580 = vmatpush.msra.mxu0 %v467
        %581 = vmatpush.msra.mxu0 %v466
        %582 = vmatpush.msra.mxu0 %v465
        %583 = vmatpush.msra.mxu0 %v464
        %584 = vmatpush.msra.mxu0 %v463
        %585 = vmatpush.msra.mxu0 %v462
        %586 = vmatpush.msra.mxu0 %v461
        %587 = vmatpush.msra.mxu0 %v460
        %588 = vmatmul.f32.gmra.mxu0 %v444
        %v589 = vpop.f32.mrf.mxu0
        %v590 = vadd.f32 %v495, %v589
        %591 = vmatmul.f32.gmra.mxu0 %v445
        %v592 = vpop.f32.mrf.mxu0
        %v593 = vadd.f32 %v500, %v592
        %594 = vmatmul.f32.gmra.mxu0 %v446
        %v595 = vpop.f32.mrf.mxu0
        %v596 = vadd.f32 %v505, %v595
        %597 = vmatmul.f32.gmra.mxu0 %v447
        %v598 = vpop.f32.mrf.mxu0
        %v599 = vadd.f32 %v510, %v598
        %600 = vmatmul.f32.gmra.mxu0 %v448
        %v601 = vpop.f32.mrf.mxu0
        %v602 = vadd.f32 %v515, %v601
        %603 = vmatmul.f32.gmra.mxu0 %v449
        %v604 = vpop.f32.mrf.mxu0
        %v605 = vadd.f32 %v520, %v604
        %606 = vmatmul.f32.gmra.mxu0 %v450
        %v607 = vpop.f32.mrf.mxu0
        %v608 = vadd.f32 %v525, %v607
        %609 = vmatmul.f32.gmra.mxu0 %v451
        %v610 = vpop.f32.mrf.mxu0
        %v611 = vadd.f32 %v530, %v610
        %612 = vmatmul.f32.gmra.mxu0 %v452
        %v613 = vpop.f32.mrf.mxu0
        %v614 = vadd.f32 %v535, %v613
        %615 = vmatmul.f32.gmra.mxu0 %v453
        %v616 = vpop.f32.mrf.mxu0
        %v617 = vadd.f32 %v540, %v616
        %618 = vmatmul.f32.gmra.mxu0 %v454
        %v619 = vpop.f32.mrf.mxu0
        %v620 = vadd.f32 %v545, %v619
        %621 = vmatmul.f32.gmra.mxu0 %v455
        %v622 = vpop.f32.mrf.mxu0
        %v623 = vadd.f32 %v550, %v622
        %624 = vmatmul.f32.gmra.mxu0 %v456
        %v625 = vpop.f32.mrf.mxu0
        %v626 = vadd.f32 %v555, %v625
        %627 = vmatmul.f32.gmra.mxu0 %v457
        %v628 = vpop.f32.mrf.mxu0
        %v629 = vadd.f32 %v560, %v628
        %630 = vmatmul.f32.gmra.mxu0 %v458
        %v631 = vpop.f32.mrf.mxu0
        %v632 = vadd.f32 %v565, %v631
        %633 = vmatmul.f32.gmra.mxu0 %v459
        %v634 = vpop.f32.mrf.mxu0
        %v635 = vadd.f32 %v570, %v634
        %636 = vdwg.mxu0
        %vm637 = vcmp.gt.f32.partialorder %v590, 0.0
        %vm638 = vcmp.gt.f32.partialorder %v593, 0.0
        %vm639 = vcmp.gt.f32.partialorder %v596, 0.0
        %vm640 = vcmp.gt.f32.partialorder %v599, 0.0
        %vm641 = vcmp.gt.f32.partialorder %v602, 0.0
        %vm642 = vcmp.gt.f32.partialorder %v605, 0.0
        %vm643 = vcmp.gt.f32.partialorder %v608, 0.0
        %vm644 = vcmp.gt.f32.partialorder %v611, 0.0
        %vm645 = vcmp.gt.f32.partialorder %v614, 0.0
        %vm646 = vcmp.gt.f32.partialorder %v617, 0.0
        %vm647 = vcmp.gt.f32.partialorder %v620, 0.0
        %vm648 = vcmp.gt.f32.partialorder %v623, 0.0
        %vm649 = vcmp.gt.f32.partialorder %v626, 0.0
        %vm650 = vcmp.gt.f32.partialorder %v629, 0.0
        %vm651 = vcmp.gt.f32.partialorder %v632, 0.0
        %vm652 = vcmp.gt.f32.partialorder %v635, 0.0
        %v653 = vmul.f32 %v590, 0.2
        %v654 = vmul.f32 %v593, 0.2
        %v655 = vmul.f32 %v596, 0.2
        %v656 = vmul.f32 %v599, 0.2
        %v657 = vmul.f32 %v602, 0.2
        %v658 = vmul.f32 %v605, 0.2
        %v659 = vmul.f32 %v608, 0.2
        %v660 = vmul.f32 %v611, 0.2
        %v661 = vmul.f32 %v614, 0.2
        %v662 = vmul.f32 %v617, 0.2
        %v663 = vmul.f32 %v620, 0.2
        %v664 = vmul.f32 %v623, 0.2
        %v665 = vmul.f32 %v626, 0.2
        %v666 = vmul.f32 %v629, 0.2
        %v667 = vmul.f32 %v632, 0.2
        %v668 = vmul.f32 %v635, 0.2
        %v669 = vsel %vm637, %v590, %v653
        %v670 = vsel %vm638, %v593, %v654
        %v671 = vsel %vm639, %v596, %v655
        %v672 = vsel %vm640, %v599, %v656
        %v673 = vsel %vm641, %v602, %v657
        %v674 = vsel %vm642, %v605, %v658
        %v675 = vsel %vm643, %v608, %v659
        %v676 = vsel %vm644, %v611, %v660
        %v677 = vsel %vm645, %v614, %v661
        %v678 = vsel %vm646, %v617, %v662
        %v679 = vsel %vm647, %v620, %v663
        %v680 = vsel %vm648, %v623, %v664
        %v681 = vsel %vm649, %v626, %v665
        %v682 = vsel %vm650, %v629, %v666
        %v683 = vsel %vm651, %v632, %v667
        %v684 = vsel %vm652, %v635, %v668
        %v685 = vld [vmem:[#allocation7] sm:$0xff]
        %v686 = vld [vmem:[#allocation7 + $0x8] sm:$0xff]
        %v687 = vld [vmem:[#allocation7 + $0x10] sm:$0xff]
        %v688 = vld [vmem:[#allocation7 + $0x18] sm:$0xff]
        %v689 = vld [vmem:[#allocation7 + $0x20] sm:$0xff]
        %v690 = vld [vmem:[#allocation7 + $0x28] sm:$0xff]
        %v691 = vld [vmem:[#allocation7 + $0x30] sm:$0xff]
        %v692 = vld [vmem:[#allocation7 + $0x38] sm:$0xff]
        %v693 = vld [vmem:[#allocation7 + $0x40] sm:$0xff]
        %v694 = vld [vmem:[#allocation7 + $0x48] sm:$0xff]
        %v695 = vld [vmem:[#allocation7 + $0x50] sm:$0xff]
        %v696 = vld [vmem:[#allocation7 + $0x58] sm:$0xff]
        %v697 = vld [vmem:[#allocation7 + $0x60] sm:$0xff]
        %v698 = vld [vmem:[#allocation7 + $0x68] sm:$0xff]
        %v699 = vld [vmem:[#allocation7 + $0x70] sm:$0xff]
        %v700 = vld [vmem:[#allocation7 + $0x78] sm:$0xff]
        %v701 = vld [vmem:[%s4] sm:$0xff]
        %v702 = vld [vmem:[%s4 + $0x8] sm:$0xff]
        %v703 = vld [vmem:[%s4 + $0x10] sm:$0xff]
        %v704 = vld [vmem:[%s4 + $0x18] sm:$0xff]
        %v705 = vld [vmem:[%s4 + $0x20] sm:$0xff]
        %v706 = vld [vmem:[%s4 + $0x28] sm:$0xff]
        %v707 = vld [vmem:[%s4 + $0x30] sm:$0xff]
        %v708 = vld [vmem:[%s4 + $0x38] sm:$0xff]
        %v709 = vld [vmem:[%s4 + $0x40] sm:$0xff]
        %v710 = vld [vmem:[%s4 + $0x48] sm:$0xff]
        %v711 = vld [vmem:[%s4 + $0x50] sm:$0xff]
        %v712 = vld [vmem:[%s4 + $0x58] sm:$0xff]
        %v713 = vld [vmem:[%s4 + $0x60] sm:$0xff]
        %v714 = vld [vmem:[%s4 + $0x68] sm:$0xff]
        %v715 = vld [vmem:[%s4 + $0x70] sm:$0xff]
        %v716 = vld [vmem:[%s4 + $0x78] sm:$0xff]
        %718 = vset.pattern.permute.xlu0 0
        %719 = vperm.xlu0 %718, %v701
        %v720 = vpop.permute.xlu0 %719
        %723 = vset.pattern.permute.xlu0 0
        %724 = vperm.xlu0 %723, %v702
        %v725 = vpop.permute.xlu0 %724
        %728 = vset.pattern.permute.xlu0 0
        %729 = vperm.xlu0 %728, %v703
        %v730 = vpop.permute.xlu0 %729
        %733 = vset.pattern.permute.xlu0 0
        %734 = vperm.xlu0 %733, %v704
        %v735 = vpop.permute.xlu0 %734
        %738 = vset.pattern.permute.xlu0 0
        %739 = vperm.xlu0 %738, %v705
        %v740 = vpop.permute.xlu0 %739
        %743 = vset.pattern.permute.xlu0 0
        %744 = vperm.xlu0 %743, %v706
        %v745 = vpop.permute.xlu0 %744
        %748 = vset.pattern.permute.xlu0 0
        %749 = vperm.xlu0 %748, %v707
        %v750 = vpop.permute.xlu0 %749
        %753 = vset.pattern.permute.xlu0 0
        %754 = vperm.xlu0 %753, %v708
        %v755 = vpop.permute.xlu0 %754
        %758 = vset.pattern.permute.xlu0 0
        %759 = vperm.xlu0 %758, %v709
        %v760 = vpop.permute.xlu0 %759
        %763 = vset.pattern.permute.xlu0 0
        %764 = vperm.xlu0 %763, %v710
        %v765 = vpop.permute.xlu0 %764
        %768 = vset.pattern.permute.xlu0 0
        %769 = vperm.xlu0 %768, %v711
        %v770 = vpop.permute.xlu0 %769
        %773 = vset.pattern.permute.xlu0 0
        %774 = vperm.xlu0 %773, %v712
        %v775 = vpop.permute.xlu0 %774
        %778 = vset.pattern.permute.xlu0 0
        %779 = vperm.xlu0 %778, %v713
        %v780 = vpop.permute.xlu0 %779
        %783 = vset.pattern.permute.xlu0 0
        %784 = vperm.xlu0 %783, %v714
        %v785 = vpop.permute.xlu0 %784
        %788 = vset.pattern.permute.xlu0 0
        %789 = vperm.xlu0 %788, %v715
        %v790 = vpop.permute.xlu0 %789
        %793 = vset.pattern.permute.xlu0 0
        %794 = vperm.xlu0 %793, %v716
        %v795 = vpop.permute.xlu0 %794
        %797 = vmatpush.msra.mxu0 %v684
        %798 = vmatpush.msra.mxu0 %v683
        %799 = vmatpush.msra.mxu0 %v682
        %800 = vmatpush.msra.mxu0 %v681
        %801 = vmatpush.msra.mxu0 %v680
        %802 = vmatpush.msra.mxu0 %v679
        %803 = vmatpush.msra.mxu0 %v678
        %804 = vmatpush.msra.mxu0 %v677
        %805 = vmatpush.msra.mxu0 %v676
        %806 = vmatpush.msra.mxu0 %v675
        %807 = vmatpush.msra.mxu0 %v674
        %808 = vmatpush.msra.mxu0 %v673
        %809 = vmatpush.msra.mxu0 %v672
        %810 = vmatpush.msra.mxu0 %v671
        %811 = vmatpush.msra.mxu0 %v670
        %812 = vmatpush.msra.mxu0 %v669
        %813 = vmatmul.f32.gmra.mxu0 %v685
        %v814 = vpop.f32.mrf.mxu0
        %v815 = vadd.f32 %v720, %v814
        %816 = vmatmul.f32.gmra.mxu0 %v686
        %v817 = vpop.f32.mrf.mxu0
        %v818 = vadd.f32 %v725, %v817
        %819 = vmatmul.f32.gmra.mxu0 %v687
        %v820 = vpop.f32.mrf.mxu0
        %v821 = vadd.f32 %v730, %v820
        %822 = vmatmul.f32.gmra.mxu0 %v688
        %v823 = vpop.f32.mrf.mxu0
        %v824 = vadd.f32 %v735, %v823
        %825 = vmatmul.f32.gmra.mxu0 %v689
        %v826 = vpop.f32.mrf.mxu0
        %v827 = vadd.f32 %v740, %v826
        %828 = vmatmul.f32.gmra.mxu0 %v690
        %v829 = vpop.f32.mrf.mxu0
        %v830 = vadd.f32 %v745, %v829
        %831 = vmatmul.f32.gmra.mxu0 %v691
        %v832 = vpop.f32.mrf.mxu0
        %v833 = vadd.f32 %v750, %v832
        %834 = vmatmul.f32.gmra.mxu0 %v692
        %v835 = vpop.f32.mrf.mxu0
        %v836 = vadd.f32 %v755, %v835
        %837 = vmatmul.f32.gmra.mxu0 %v693
        %v838 = vpop.f32.mrf.mxu0
        %v839 = vadd.f32 %v760, %v838
        %840 = vmatmul.f32.gmra.mxu0 %v694
        %v841 = vpop.f32.mrf.mxu0
        %v842 = vadd.f32 %v765, %v841
        %843 = vmatmul.f32.gmra.mxu0 %v695
        %v844 = vpop.f32.mrf.mxu0
        %v845 = vadd.f32 %v770, %v844
        %846 = vmatmul.f32.gmra.mxu0 %v696
        %v847 = vpop.f32.mrf.mxu0
        %v848 = vadd.f32 %v775, %v847
        %849 = vmatmul.f32.gmra.mxu0 %v697
        %v850 = vpop.f32.mrf.mxu0
        %v851 = vadd.f32 %v780, %v850
        %852 = vmatmul.f32.gmra.mxu0 %v698
        %v853 = vpop.f32.mrf.mxu0
        %v854 = vadd.f32 %v785, %v853
        %855 = vmatmul.f32.gmra.mxu0 %v699
        %v856 = vpop.f32.mrf.mxu0
        %v857 = vadd.f32 %v790, %v856
        %858 = vmatmul.f32.gmra.mxu0 %v700
        %v859 = vpop.f32.mrf.mxu0
        %v860 = vadd.f32 %v795, %v859
        %861 = vdwg.mxu0
        %vm862 = vcmp.gt.f32.partialorder %v815, 0.0
        %vm863 = vcmp.gt.f32.partialorder %v818, 0.0
        %vm864 = vcmp.gt.f32.partialorder %v821, 0.0
        %vm865 = vcmp.gt.f32.partialorder %v824, 0.0
        %vm866 = vcmp.gt.f32.partialorder %v827, 0.0
        %vm867 = vcmp.gt.f32.partialorder %v830, 0.0
        %vm868 = vcmp.gt.f32.partialorder %v833, 0.0
        %vm869 = vcmp.gt.f32.partialorder %v836, 0.0
        %vm870 = vcmp.gt.f32.partialorder %v839, 0.0
        %vm871 = vcmp.gt.f32.partialorder %v842, 0.0
        %vm872 = vcmp.gt.f32.partialorder %v845, 0.0
        %vm873 = vcmp.gt.f32.partialorder %v848, 0.0
        %vm874 = vcmp.gt.f32.partialorder %v851, 0.0
        %vm875 = vcmp.gt.f32.partialorder %v854, 0.0
        %vm876 = vcmp.gt.f32.partialorder %v857, 0.0
        %vm877 = vcmp.gt.f32.partialorder %v860, 0.0
        %v878 = vmul.f32 %v815, 0.2
        %v879 = vmul.f32 %v818, 0.2
        %v880 = vmul.f32 %v821, 0.2
        %v881 = vmul.f32 %v824, 0.2
        %v882 = vmul.f32 %v827, 0.2
        %v883 = vmul.f32 %v830, 0.2
        %v884 = vmul.f32 %v833, 0.2
        %v885 = vmul.f32 %v836, 0.2
        %v886 = vmul.f32 %v839, 0.2
        %v887 = vmul.f32 %v842, 0.2
        %v888 = vmul.f32 %v845, 0.2
        %v889 = vmul.f32 %v848, 0.2
        %v890 = vmul.f32 %v851, 0.2
        %v891 = vmul.f32 %v854, 0.2
        %v892 = vmul.f32 %v857, 0.2
        %v893 = vmul.f32 %v860, 0.2
        %v894 = vsel %vm862, %v815, %v878
        %v895 = vsel %vm863, %v818, %v879
        %v896 = vsel %vm864, %v821, %v880
        %v897 = vsel %vm865, %v824, %v881
        %v898 = vsel %vm866, %v827, %v882
        %v899 = vsel %vm867, %v830, %v883
        %v900 = vsel %vm868, %v833, %v884
        %v901 = vsel %vm869, %v836, %v885
        %v902 = vsel %vm870, %v839, %v886
        %v903 = vsel %vm871, %v842, %v887
        %v904 = vsel %vm872, %v845, %v888
        %v905 = vsel %vm873, %v848, %v889
        %v906 = vsel %vm874, %v851, %v890
        %v907 = vsel %vm875, %v854, %v891
        %v908 = vsel %vm876, %v857, %v892
        %v909 = vsel %vm877, %v860, %v893
        %v910 = vld [vmem:[%s409] sm:$0xff]
        %v911 = vld [vmem:[%s409 + $0x8] sm:$0xff]
        %v912 = vld [vmem:[%s409 + $0x10] sm:$0xff]
        %v913 = vld [vmem:[%s409 + $0x18] sm:$0xff]
        %v914 = vld [vmem:[%s409 + $0x20] sm:$0xff]
        %v915 = vld [vmem:[%s409 + $0x28] sm:$0xff]
        %v916 = vld [vmem:[%s409 + $0x30] sm:$0xff]
        %v917 = vld [vmem:[%s409 + $0x38] sm:$0xff]
        %v918 = vld [vmem:[%s409 + $0x40] sm:$0xff]
        %v919 = vld [vmem:[%s409 + $0x48] sm:$0xff]
        %v920 = vld [vmem:[%s409 + $0x50] sm:$0xff]
        %v921 = vld [vmem:[%s409 + $0x58] sm:$0xff]
        %v922 = vld [vmem:[%s409 + $0x60] sm:$0xff]
        %v923 = vld [vmem:[%s409 + $0x68] sm:$0xff]
        %v924 = vld [vmem:[%s409 + $0x70] sm:$0xff]
        %v925 = vld [vmem:[%s409 + $0x78] sm:$0xff]
        %v926 = vmul.f32 %v894, %v910
        %v927 = vmul.f32 %v895, %v911
        %v928 = vmul.f32 %v896, %v912
        %v929 = vmul.f32 %v897, %v913
        %v930 = vmul.f32 %v898, %v914
        %v931 = vmul.f32 %v899, %v915
        %v932 = vmul.f32 %v900, %v916
        %v933 = vmul.f32 %v901, %v917
        %v934 = vmul.f32 %v902, %v918
        %v935 = vmul.f32 %v903, %v919
        %v936 = vmul.f32 %v904, %v920
        %v937 = vmul.f32 %v905, %v921
        %v938 = vmul.f32 %v906, %v922
        %v939 = vmul.f32 %v907, %v923
        %v940 = vmul.f32 %v908, %v924
        %v941 = vmul.f32 %v909, %v925
        %v942 = vadd.f32 %v926, %v927
        %v943 = vadd.f32 %v942, %v928
        %v944 = vadd.f32 %v943, %v929
        %v945 = vadd.f32 %v944, %v930
        %v946 = vadd.f32 %v945, %v931
        %v947 = vadd.f32 %v946, %v932
        %v948 = vadd.f32 %v947, %v933
        %v949 = vadd.f32 %v948, %v934
        %v950 = vadd.f32 %v949, %v935
        %v951 = vadd.f32 %v950, %v936
        %v952 = vadd.f32 %v951, %v937
        %v953 = vadd.f32 %v952, %v938
        %v954 = vadd.f32 %v953, %v939
        %v955 = vadd.f32 %v954, %v940
        %v956 = vadd.f32 %v955, %v941
        %v957 = vrot.slane %v956, 4
        %v958 = vadd.f32 %v956, %v957
        %v959 = vrot.slane %v958, 2
        %v960 = vadd.f32 %v958, %v959
        %v961 = vrot.slane %v960, 1
        %v962 = vadd.f32 %v960, %v961
        %s963 = sld [smem:[#allocation2]]
        %v964 = vstv %s963
        %v965 = vadd.f32 %v962, %v964
        %966 = vst [vmem:[%s443] sm:$0x1] %v965
        %s967 = sand.u32 %s189, 1
        %s968 = scalar_lea.sflag [#allocation6], %s967
        %s969 = sand.u32 %s189, 1
        %s970 = scalar_lea.vmem [#allocation10], %s969
        // Predicated region
        $region99: #{tpu_custom_call.1} parent=81 // pred_check
          %p971 = pneg %p199
        $region100: #{tpu_custom_call.1} parent=81 // pred_check_branch
          %973 = sbr.rel (%p971) target = $region102
        $region101: #{tpu_custom_call.1} parent=81 // pred_region
          %975 = vsyncadd %s968, 0
          %s976 = scalar_lea.hbm %s7, %s24
          %s978 = sshll.u32 %s970, 4
          %s979 = int_to_ptr.vmem [resolvable:$true] %s978
          %s980 = sshll.u32 %s976, 4
          %s981 = int_to_ptr.hbm [resolvable:$true] %s980
          %983 = dma.vmem_to_hbm [thread:$0]  %s979, 16, %s981, %s968
        $region102: #{tpu_custom_call.1} parent=81 // pred_fallthru
          _
      $region82: #{tpu_custom_call.1} parent=5 // pred_fallthru
        _
      %p984 = scmp.le.s32.totalorder 2, %s19
      // Predicated region
      $region103: #{tpu_custom_call.1} parent=5 // pred_check
        %p985 = pneg %p984
      $region104: #{tpu_custom_call.1} parent=5 // pred_check_branch
        %987 = sbr.rel (%p985) target = $region106
      $region105: #{tpu_custom_call.1} parent=5 // pred_region
        %s988 = ssub.s32 %s19, 2
        // Predicated region
        $region107: #{tpu_custom_call.1} parent=105 // pred_check
          %p989 = pneg %p205
        $region108: #{tpu_custom_call.1} parent=105 // pred_check_branch
          %991 = sbr.rel (%p989) target = $region110
        $region109: #{tpu_custom_call.1} parent=105 // pred_region
          %s992 = sand.u32 %s190, 1
          %s993 = scalar_lea.sflag [#allocation6], %s992
          %s994 = sand.u32 %s190, 1
          %s995 = scalar_lea.vmem [#allocation10], %s994
          %997 = dma.done %s993, 16
        $region110: #{tpu_custom_call.1} parent=105 // pred_fallthru
          _
      $region106: #{tpu_custom_call.1} parent=5 // pred_fallthru
        _
    $region6: #{tpu_custom_call.1} parent=1 // loop_footer
      %s23 = sadd.s32 1, %s19
    $region7: #{tpu_custom_call.1} parent=1 // loop_footer_branch
      %18 = sbr.rel target = $region3
    $region8: #{tpu_custom_call.1} parent=1 // loop_exit
      _
    %998 = vsyncpa [#allocation5], 1
    %s999 = scalar_lea.sflag [#allocation5], 1
    %1000 = vsyncpa %s999, 1
    %1001 = vsyncpa [#allocation8], 1
    %1002 = vsyncpa [#allocation6], 1
    %s1003 = scalar_lea.sflag [#allocation6], 1
    %1004 = vsyncpa %s1003, 1

</llo_original>
